<compile_context>
chip_gen: v7x
topology: tpu7x:2x2x1
jax: 0.10.0
libtpu: 0.0.40
codegen_flags: <defaults>
</compile_context>

<pallas_src>
import jax
import jax.numpy as jnp
from jax.experimental import pallas as pl
from jax.experimental.pallas import tpu as pltpu


def lstm_cell_kernel(h_ref, w_ref, c_ref,
                     wgh_ref, wgw_ref, bg_ref,
                     wp_ref, bp_ref,
                     y_ref, h_new_ref, c_new_ref):
    H = h_ref.shape[1]

    h = h_ref[...]                     # [B, H]   f32
    w = w_ref[...]                     # [B, W]   f32
    c = c_ref[...]                     # [B, H]   f32

    # Fused gate pre-activations: one wide [B, 4H] result.
    # x @ W_gates is split by rows of W_gates so no concat([h, w]) is needed:
    #   z = h @ Wg[:H] + w @ Wg[H:]
    h_bf = h.astype(jnp.bfloat16)
    w_bf = w.astype(jnp.bfloat16)
    z = (jnp.dot(h_bf, wgh_ref[...], preferred_element_type=jnp.float32)
         + jnp.dot(w_bf, wgw_ref[...], preferred_element_type=jnp.float32)
         + bg_ref[...])                # [B, 4H]  f32

    # Two wide activations (slices are 128-lane aligned: H == 128).
    fio = jax.nn.sigmoid(z[:, :3 * H])     # [B, 3H]
    g = jnp.tanh(z[:, 3 * H:])             # [B, H]

    f = fio[:, :H]
    i = fio[:, H:2 * H]
    o = fio[:, 2 * H:3 * H]

    c_new = f * c + i * g                  # [B, H]  f32
    h_new = o * jnp.tanh(c_new)            # [B, H]  f32

    # Lane-dense (N padded to 128) output projection; padded lanes carry the
    # zero bias padding and are sliced off by the caller.
    y = (jnp.dot(h_new.astype(jnp.bfloat16), wp_ref[...],
                 preferred_element_type=jnp.float32)
         + bp_ref[...])                    # [B, 128] f32

    c_new_ref[...] = c_new
    h_new_ref[...] = h_new
    y_ref[...] = y


def _linear_params(key, in_dim, out_dim):
    # Deterministic init mimicking nn.Linear (uniform +/- 1/sqrt(fan_in)).
    k_w, k_b = jax.random.split(key)
    bound = 1.0 / jnp.sqrt(jnp.float32(in_dim))
    # store as [in_dim, out_dim] (i.e. W^T) for direct x @ W^T
    w_t = jax.random.uniform(k_w, (in_dim, out_dim), jnp.float32, -bound, bound)
    b = jax.random.uniform(k_b, (1, out_dim), jnp.float32, -bound, bound)
    return w_t, b


def pack_params(raw_params, H, W, n_pad=128, weight_dtype=jnp.bfloat16):
    """Fuse gate weights, split by input rows (h vs w), pad the projection."""
    (wf, bf), (wi, bi), (wo, bo), (wg, bg), (wp, bp) = raw_params

    w_gates = jnp.concatenate([wf, wi, wo, wg], axis=1)      # [H+W, 4H]
    b_gates = jnp.concatenate([bf, bi, bo, bg], axis=1)      # [1, 4H]  (f32)

    w_gates_h = w_gates[:H].astype(weight_dtype)              # [H, 4H]
    w_gates_w = w_gates[H:].astype(weight_dtype)              # [W, 4H]

    # Lane-dense output projection: pad N = W (64) -> n_pad (128) with zeros.
    wp_pad = (jnp.zeros((H, n_pad), jnp.float32)
              .at[:, :W].set(wp).astype(weight_dtype))        # [H, 128]
    bp_pad = jnp.zeros((1, n_pad), jnp.float32).at[:, :W].set(bp)  # [1, 128]

    return w_gates_h, w_gates_w, b_gates, wp_pad, bp_pad


def ty_lstm_forward(word_vector, hidden_state_vector, cell_state_vector, packed):
    """word_vector [B,W], hidden_state_vector [B,H], cell_state_vector [B,H]."""
    B, W = word_vector.shape
    _, H = hidden_state_vector.shape

    w_gates_h, w_gates_w, b_gates, wp_pad, bp_pad = packed
    n_pad = wp_pad.shape[1]

    vmem = pl.BlockSpec(memory_space=pltpu.MemorySpace.VMEM)
    out_shapes = (
        jax.ShapeDtypeStruct((B, n_pad), jnp.float32),   # padded output word vec
        jax.ShapeDtypeStruct((B, H), jnp.float32),       # new hidden state
        jax.ShapeDtypeStruct((B, H), jnp.float32),       # new cell state
    )

    flops = 2 * B * (H + W) * (4 * H) + 2 * B * H * n_pad + 6 * B * H
    transcendentals = 5 * B * H                     # sigmoid(3H) + 2x tanh(H)
    bytes_accessed = (
        2 * (w_gates_h.size + w_gates_w.size + wp_pad.size)   # bf16 weights
        + 4 * (b_gates.size + bp_pad.size)                    # f32 biases
        + 4 * B * (W + H + H)                                 # f32 inputs
        + 4 * B * (n_pad + H + H)                             # f32 outputs
    )

    y_pad, h_new, c_new = pl.pallas_call(
        lstm_cell_kernel,
        out_shape=out_shapes,
        in_specs=[vmem] * 8,
        out_specs=(vmem, vmem, vmem),
        cost_estimate=pl.CostEstimate(
            flops=flops,
            transcendentals=transcendentals,
            bytes_accessed=bytes_accessed),
        compiler_params=pltpu.CompilerParams(
            vmem_limit_bytes=32 * 1024 * 1024),
    )(hidden_state_vector, word_vector, cell_state_vector,
      w_gates_h, w_gates_w, b_gates, wp_pad, bp_pad)

    return y_pad[:, :W], h_new, c_new


def _reference_f32(word, hidden, cell, raw_params):
    (wf, bf), (wi, bi), (wo, bo), (wg, bg), (wp, bp) = raw_params
    x = jnp.concatenate([hidden, word], axis=1)
    f = jax.nn.sigmoid(x @ wf + bf)
    i = jax.nn.sigmoid(x @ wi + bi)
    o = jax.nn.sigmoid(x @ wo + bo)
    g = jnp.tanh(x @ wg + bg)
    c_new = f * cell + i * g
    h_new = o * jnp.tanh(c_new)
    y = h_new @ wp + bp
    return y, h_new, c_new


def _reference_bf16(word, hidden, cell, raw_params):
    # Mirrors the kernel's numerics: bf16 matmul operands, f32 accumulation,
    # f32 element-wise math.
    def q(a):
        return a.astype(jnp.bfloat16).astype(jnp.float32)

    (wf, bf), (wi, bi), (wo, bo), (wg, bg), (wp, bp) = raw_params
    x = jnp.concatenate([q(hidden), q(word)], axis=1)
    f = jax.nn.sigmoid(x @ q(wf) + bf)
    i = jax.nn.sigmoid(x @ q(wi) + bi)
    o = jax.nn.sigmoid(x @ q(wo) + bo)
    g = jnp.tanh(x @ q(wg) + bg)
    c_new = f * cell + i * g
    h_new = o * jnp.tanh(c_new)
    y = q(h_new) @ q(wp) + bp
    return y, h_new, c_new


if __name__ == "__main__":
    B = 8          # batch
    W = 64         # len_word_vector
    H = 128        # len_hidden_state_vector (== len_cell_state_vector)

    key = jax.random.PRNGKey(0)
    k_word, k_hid, k_cell, k_f, k_i, k_o, k_g, k_p = jax.random.split(key, 8)

    word_vector = jax.random.normal(k_word, (B, W), jnp.float32)
    hidden_state_vector = jax.random.normal(k_hid, (B, H), jnp.float32)
    cell_state_vector = jax.random.normal(k_cell, (B, H), jnp.float32)

    raw_params = (
        _linear_params(k_f, H + W, H),   # forget gate
        _linear_params(k_i, H + W, H),   # remember (input) gate
        _linear_params(k_o, H + W, H),   # output gate
        _linear_params(k_g, H + W, H),   # candidate values (tanh)
        _linear_params(k_p, H, W),       # hidden -> predicted word
    )
    packed = pack_params(raw_params, H, W)

    fwd = jax.jit(ty_lstm_forward)
    y, h_new, c_new = fwd(
        word_vector, hidden_state_vector, cell_state_vector, packed)
    jax.block_until_ready((y, h_new, c_new))

    # Tight check against a reference with identical (bf16-weight) numerics.
    y_q, h_q, c_q = _reference_bf16(
        word_vector, hidden_state_vector, cell_state_vector, raw_params)
    assert jnp.allclose(y, y_q, atol=1e-3, rtol=1e-3)
    assert jnp.allclose(h_new, h_q, atol=1e-3, rtol=1e-3)
    assert jnp.allclose(c_new, c_q, atol=1e-3, rtol=1e-3)

    # Sanity check against the pure-f32 reference (bf16 weights => looser tol).
    y_ref, h_ref, c_ref = _reference_f32(
        word_vector, hidden_state_vector, cell_state_vector, raw_params)
    assert jnp.allclose(y, y_ref, atol=1e-1, rtol=1e-1)
    assert jnp.allclose(h_new, h_ref, atol=1e-1, rtol=1e-1)
    assert jnp.allclose(c_new, c_ref, atol=1e-1, rtol=1e-1)

    print("KERNEL_OK")
</pallas_src>

<mosaic_0001>
module attributes {stable_mosaic.version = 11 : i64} {
  func.func @lstm_cell_kernel(%arg0: memref<8x128xf32, #tpu.memory_space<vmem>>, %arg1: memref<8x64xf32, #tpu.memory_space<vmem>>, %arg2: memref<8x128xf32, #tpu.memory_space<vmem>>, %arg3: memref<128x512xbf16, #tpu.memory_space<vmem>>, %arg4: memref<64x512xbf16, #tpu.memory_space<vmem>>, %arg5: memref<1x512xf32, #tpu.memory_space<vmem>>, %arg6: memref<128x128xbf16, #tpu.memory_space<vmem>>, %arg7: memref<1x128xf32, #tpu.memory_space<vmem>>, %arg8: memref<8x128xf32, #tpu.memory_space<vmem>>, %arg9: memref<8x128xf32, #tpu.memory_space<vmem>>, %arg10: memref<8x128xf32, #tpu.memory_space<vmem>>) attributes {dimension_semantics = [], scalar_prefetch = 0 : i64, scratch_operands = 0 : i64, tpu.core_type = #tpu.core_type<tc>} {
    %c0 = arith.constant 0 : index
    %c0_0 = arith.constant 0 : index
    %0 = vector.load %arg0[%c0, %c0_0] : memref<8x128xf32, #tpu.memory_space<vmem>>, vector<8x128xf32>
    %c0_1 = arith.constant 0 : index
    %c0_2 = arith.constant 0 : index
    %1 = vector.load %arg1[%c0_1, %c0_2] : memref<8x64xf32, #tpu.memory_space<vmem>>, vector<8x64xf32>
    %c0_3 = arith.constant 0 : index
    %c0_4 = arith.constant 0 : index
    %2 = vector.load %arg2[%c0_3, %c0_4] : memref<8x128xf32, #tpu.memory_space<vmem>>, vector<8x128xf32>
    %3 = arith.truncf %0 : vector<8x128xf32> to vector<8x128xbf16>
    %4 = arith.truncf %1 : vector<8x64xf32> to vector<8x64xbf16>
    %c0_5 = arith.constant 0 : index
    %c0_6 = arith.constant 0 : index
    %5 = vector.load %arg3[%c0_5, %c0_6] : memref<128x512xbf16, #tpu.memory_space<vmem>>, vector<128x512xbf16>
    %cst = arith.constant dense<0.000000e+00> : vector<8x512xf32>
    %6 = tpu.matmul %3, %5, %cst {dimension_numbers = #tpu.dot_dimension_numbers<[1], [0], [0], [1], [0, 0, 1, 1], [], []>} : vector<8x128xbf16>, vector<128x512xbf16>, vector<8x512xf32> -> vector<8x512xf32>
    %c0_7 = arith.constant 0 : index
    %c0_8 = arith.constant 0 : index
    %7 = vector.load %arg4[%c0_7, %c0_8] : memref<64x512xbf16, #tpu.memory_space<vmem>>, vector<64x512xbf16>
    %cst_9 = arith.constant dense<0.000000e+00> : vector<8x512xf32>
    %8 = tpu.matmul %4, %7, %cst_9 {dimension_numbers = #tpu.dot_dimension_numbers<[1], [0], [0], [1], [0, 0, 1, 1], [], []>} : vector<8x64xbf16>, vector<64x512xbf16>, vector<8x512xf32> -> vector<8x512xf32>
    %9 = arith.addf %6, %8 : vector<8x512xf32>
    %c0_10 = arith.constant 0 : index
    %c0_11 = arith.constant 0 : index
    %10 = vector.load %arg5[%c0_10, %c0_11] : memref<1x512xf32, #tpu.memory_space<vmem>>, vector<1x512xf32>
    %11 = vector.broadcast %10 : vector<1x512xf32> to vector<8x512xf32>
    %12 = arith.addf %9, %11 : vector<8x512xf32>
    %13 = vector.extract_strided_slice %12 {offsets = [0, 0], sizes = [8, 384], strides = [1, 1]} : vector<8x512xf32> to vector<8x384xf32>
    %14 = arith.negf %13 : vector<8x384xf32>
    %15 = math.exp %14 : vector<8x384xf32>
    %cst_12 = arith.constant 1.000000e+00 : f32
    %16 = vector.broadcast %cst_12 : f32 to vector<8x384xf32>
    %17 = arith.addf %16, %15 : vector<8x384xf32>
    %18 = arith.divf %16, %17 : vector<8x384xf32>
    %19 = vector.extract_strided_slice %12 {offsets = [0, 384], sizes = [8, 128], strides = [1, 1]} : vector<8x512xf32> to vector<8x128xf32>
    %20 = math.tanh %19 : vector<8x128xf32>
    %21 = vector.extract_strided_slice %18 {offsets = [0, 0], sizes = [8, 128], strides = [1, 1]} : vector<8x384xf32> to vector<8x128xf32>
    %22 = vector.extract_strided_slice %18 {offsets = [0, 128], sizes = [8, 128], strides = [1, 1]} : vector<8x384xf32> to vector<8x128xf32>
    %23 = vector.extract_strided_slice %18 {offsets = [0, 256], sizes = [8, 128], strides = [1, 1]} : vector<8x384xf32> to vector<8x128xf32>
    %24 = arith.mulf %21, %2 : vector<8x128xf32>
    %25 = arith.mulf %22, %20 : vector<8x128xf32>
    %26 = arith.addf %24, %25 : vector<8x128xf32>
    %27 = math.tanh %26 : vector<8x128xf32>
    %28 = arith.mulf %23, %27 : vector<8x128xf32>
    %29 = arith.truncf %28 : vector<8x128xf32> to vector<8x128xbf16>
    %c0_13 = arith.constant 0 : index
    %c0_14 = arith.constant 0 : index
    %30 = vector.load %arg6[%c0_13, %c0_14] : memref<128x128xbf16, #tpu.memory_space<vmem>>, vector<128x128xbf16>
    %cst_15 = arith.constant dense<0.000000e+00> : vector<8x128xf32>
    %31 = tpu.matmul %29, %30, %cst_15 {dimension_numbers = #tpu.dot_dimension_numbers<[1], [0], [0], [1], [0, 0, 1, 1], [], []>} : vector<8x128xbf16>, vector<128x128xbf16>, vector<8x128xf32> -> vector<8x128xf32>
    %c0_16 = arith.constant 0 : index
    %c0_17 = arith.constant 0 : index
    %32 = vector.load %arg7[%c0_16, %c0_17] : memref<1x128xf32, #tpu.memory_space<vmem>>, vector<1x128xf32>
    %33 = vector.broadcast %32 : vector<1x128xf32> to vector<8x128xf32>
    %34 = arith.addf %31, %33 : vector<8x128xf32>
    %c0_18 = arith.constant 0 : index
    %c0_19 = arith.constant 0 : index
    %35 = vector.load %arg10[%c0_18, %c0_19] : memref<8x128xf32, #tpu.memory_space<vmem>>, vector<8x128xf32>
    tpu.vector_store %arg10[%c0_18, %c0_19], %26 {strides = array<i32>} : memref<8x128xf32, #tpu.memory_space<vmem>>, vector<8x128xf32>,
    %c0_20 = arith.constant 0 : index
    %c0_21 = arith.constant 0 : index
    %36 = vector.load %arg9[%c0_20, %c0_21] : memref<8x128xf32, #tpu.memory_space<vmem>>, vector<8x128xf32>
    tpu.vector_store %arg9[%c0_20, %c0_21], %28 {strides = array<i32>} : memref<8x128xf32, #tpu.memory_space<vmem>>, vector<8x128xf32>,
    %c0_22 = arith.constant 0 : index
    %c0_23 = arith.constant 0 : index
    %37 = vector.load %arg8[%c0_22, %c0_23] : memref<8x128xf32, #tpu.memory_space<vmem>>, vector<8x128xf32>
    tpu.vector_store %arg8[%c0_22, %c0_23], %34 {strides = array<i32>} : memref<8x128xf32, #tpu.memory_space<vmem>>, vector<8x128xf32>,
    return
  }
}

</mosaic_0001>

<llo_original>
// kernel: ty_lstm_forward.1
$region0: #{ty_lstm_forward.1}
  #allocation0 [shape = 'u32[]', space=smem, size = 0x4, offset = 0x4, fixed_abs, tag = 'smem constant byte address 0x4 - core index']
  #allocation1 [shape = 'u32[144,128]{1,0:T(1,128)}', space=vmem, size = 0x12000, scoped, tag = 'internal scratch']
  %s0 = inlined_call_operand.hbm [shape: f32[8,128], index: 0, kind: input, shape index: {}]
  %s1 = inlined_call_operand.hbm [shape: f32[8,64], index: 1, kind: input, shape index: {}]
  %s2 = inlined_call_operand.hbm [shape: f32[8,128], index: 2, kind: input, shape index: {}]
  %s3 = inlined_call_operand.hbm [shape: bf16[128,512], index: 3, kind: input, shape index: {}]
  %s4 = inlined_call_operand.hbm [shape: bf16[64,512], index: 4, kind: input, shape index: {}]
  %s5 = inlined_call_operand.vmem [shape: f32[1,512], index: 5, kind: input, shape index: {}]
  %s6 = inlined_call_operand.hbm [shape: bf16[128,128], index: 6, kind: input, shape index: {}]
  %s7 = inlined_call_operand.vmem [shape: f32[1,128], index: 7, kind: input, shape index: {}]
  %s8 = inlined_call_operand.hbm [shape: f32[8,128], index: 8, kind: output, shape index: {0}]
  %s9 = inlined_call_operand.hbm [shape: f32[8,128], index: 9, kind: output, shape index: {1}]
  %s10 = inlined_call_operand.hbm [shape: f32[8,128], index: 10, kind: output, shape index: {2}]
  %11 = xla_tuple %s8, %s9, %s10
  %s12 = sld [smem:[#allocation0]]
  $region82: #{ty_lstm_forward.1} parent=0
    _
  %s14 = ssub.s32 1, %s12
  %s15 = scalar_select 0, %s14, %s12
  $region1: #{ty_lstm_forward.1} parent=0
    #allocation2 [shape = 'u8[4096]{0}', space=vmem, size = 0x1000, scoped, tag = 'input window, operand 0, single buffered']
    #allocation3 [shape = 's32[1]{0}', space=sflag, size = 0x4, scoped, tag = 'scoped memory for ty_lstm_forward.1']
    #allocation4 [shape = 's32[1]{0}', space=sflag, size = 0x4, scoped, tag = 'scoped memory for ty_lstm_forward.1']
    #allocation5 [shape = 'u8[4096]{0}', space=vmem, size = 0x1000, scoped, tag = 'input window, operand 1, single buffered']
    #allocation6 [shape = 's32[1]{0}', space=sflag, size = 0x4, scoped, tag = 'scoped memory for ty_lstm_forward.1']
    #allocation7 [shape = 'u8[4096]{0}', space=vmem, size = 0x1000, scoped, tag = 'input window, operand 2, single buffered']
    #allocation8 [shape = 'u8[131072]{0}', space=vmem, size = 0x20000, scoped, tag = 'input window, operand 3, single buffered']
    #allocation9 [shape = 's32[1]{0}', space=sflag, size = 0x4, scoped, tag = 'scoped memory for ty_lstm_forward.1']
    #allocation10 [shape = 'u8[65536]{0}', space=vmem, size = 0x10000, scoped, tag = 'input window, operand 4, single buffered']
    #allocation11 [shape = 'u8[32768]{0}', space=vmem, size = 0x8000, scoped, tag = 'input window, operand 6, single buffered']
    #allocation12 [shape = 's32[1]{0}', space=sflag, size = 0x4, scoped, tag = 'scoped memory for ty_lstm_forward.1']
    #allocation13 [shape = 'u8[4096]{0}', space=vmem, size = 0x1000, scoped, tag = 'output window, operand 0, single buffered']
    #allocation14 [shape = 'u8[4096]{0}', space=vmem, size = 0x1000, scoped, tag = 'output window, operand 1, single buffered']
    #allocation15 [shape = 's32[1]{0}', space=sflag, size = 0x4, scoped, tag = 'scoped memory for ty_lstm_forward.1']
    #allocation16 [shape = 'u8[4096]{0}', space=vmem, size = 0x1000, scoped, tag = 'output window, operand 2, single buffered']
    %16 = vsyncpa [#allocation3], 0
    %17 = vsyncpa [#allocation6], 0
    %18 = vsyncpa [#allocation9], 0
    %19 = vsyncpa [#allocation12], 0
    %20 = vsyncpa [#allocation4], 0
    %21 = vsyncpa [#allocation15], 0
    // Predicated region
    $region2: #{ty_lstm_forward.1} parent=1 // pred_check
      _
    $region3: #{ty_lstm_forward.1} parent=1 // pred_check_branch
      %23 = sbr.rel (0) target = $region5
    $region4: #{ty_lstm_forward.1} parent=1 // pred_region
      %s25 = ssub.s32 128, 128
      %26 = vsyncadd [#allocation3], %s25
      %s28 = sshll.u32 [#allocation2], 4
      %s29 = int_to_ptr.vmem [resolvable:$true] %s28
      %31 = dma.hbm_to_vmem [thread:$0]  %s0, 128, %s29, [#allocation3]
    $region5: #{ty_lstm_forward.1} parent=1 // pred_fallthru
      _
    // Predicated region
    $region6: #{ty_lstm_forward.1} parent=1 // pred_check
      _
    $region7: #{ty_lstm_forward.1} parent=1 // pred_check_branch
      %33 = sbr.rel (0) target = $region9
    $region8: #{ty_lstm_forward.1} parent=1 // pred_region
      %s35 = ssub.s32 128, 128
      %36 = vsyncadd [#allocation6], %s35
      %s38 = sshll.u32 [#allocation5], 4
      %s39 = int_to_ptr.vmem [resolvable:$true] %s38
      %41 = dma.hbm_to_vmem [thread:$0]  %s1, 128, %s39, [#allocation6]
    $region9: #{ty_lstm_forward.1} parent=1 // pred_fallthru
      _
    // Predicated region
    $region10: #{ty_lstm_forward.1} parent=1 // pred_check
      _
    $region11: #{ty_lstm_forward.1} parent=1 // pred_check_branch
      %43 = sbr.rel (0) target = $region13
    $region12: #{ty_lstm_forward.1} parent=1 // pred_region
      %s45 = ssub.s32 128, 128
      %46 = vsyncadd [#allocation6], %s45
      %s48 = sshll.u32 [#allocation7], 4
      %s49 = int_to_ptr.vmem [resolvable:$true] %s48
      %51 = dma.hbm_to_vmem [thread:$0]  %s2, 128, %s49, [#allocation6]
    $region13: #{ty_lstm_forward.1} parent=1 // pred_fallthru
      _
    // Predicated region
    $region14: #{ty_lstm_forward.1} parent=1 // pred_check
      _
    $region15: #{ty_lstm_forward.1} parent=1 // pred_check_branch
      %53 = sbr.rel (0) target = $region17
    $region16: #{ty_lstm_forward.1} parent=1 // pred_region
      %s55 = ssub.s32 4096, 4096
      %56 = vsyncadd [#allocation9], %s55
      %s57 = sshll.u32 [#allocation8], 4
      %s58 = int_to_ptr.vmem [resolvable:$true] %s57
      %63 = dma.hbm_to_vmem [thread:$0]  %s3, 4096, %s58, [#allocation9], 256, 256, 16
    $region17: #{ty_lstm_forward.1} parent=1 // pred_fallthru
      _
    // Predicated region
    $region18: #{ty_lstm_forward.1} parent=1 // pred_check
      _
    $region19: #{ty_lstm_forward.1} parent=1 // pred_check_branch
      %65 = sbr.rel (0) target = $region21
    $region20: #{ty_lstm_forward.1} parent=1 // pred_region
      %s67 = ssub.s32 2048, 2048
      %68 = vsyncadd [#allocation9], %s67
      %s69 = sshll.u32 [#allocation10], 4
      %s70 = int_to_ptr.vmem [resolvable:$true] %s69
      %75 = dma.hbm_to_vmem [thread:$0]  %s4, 2048, %s70, [#allocation9], 256, 256, 16
    $region21: #{ty_lstm_forward.1} parent=1 // pred_fallthru
      _
    // Predicated region
    $region22: #{ty_lstm_forward.1} parent=1 // pred_check
      _
    $region23: #{ty_lstm_forward.1} parent=1 // pred_check_branch
      %77 = sbr.rel (0) target = $region25
    $region24: #{ty_lstm_forward.1} parent=1 // pred_region
      _
    $region25: #{ty_lstm_forward.1} parent=1 // pred_fallthru
      _
    // Predicated region
    $region26: #{ty_lstm_forward.1} parent=1 // pred_check
      _
    $region27: #{ty_lstm_forward.1} parent=1 // pred_check_branch
      %79 = sbr.rel (0) target = $region29
    $region28: #{ty_lstm_forward.1} parent=1 // pred_region
      %s81 = ssub.s32 1024, 1024
      %82 = vsyncadd [#allocation12], %s81
      %s83 = sshll.u32 [#allocation11], 4
      %s84 = int_to_ptr.vmem [resolvable:$true] %s83
      %89 = dma.hbm_to_vmem [thread:$0]  %s6, 1024, %s84, [#allocation12], 64, 64, 4
    $region29: #{ty_lstm_forward.1} parent=1 // pred_fallthru
      _
    // Predicated region
    $region30: #{ty_lstm_forward.1} parent=1 // pred_check
      _
    $region31: #{ty_lstm_forward.1} parent=1 // pred_check_branch
      %91 = sbr.rel (0) target = $region33
    $region32: #{ty_lstm_forward.1} parent=1 // pred_region
      _
    $region33: #{ty_lstm_forward.1} parent=1 // pred_fallthru
      _
    // Predicated region
    $region34: #{ty_lstm_forward.1} parent=1 // pred_check
      _
    $region35: #{ty_lstm_forward.1} parent=1 // pred_check_branch
      %93 = sbr.rel (0) target = $region37
    $region36: #{ty_lstm_forward.1} parent=1 // pred_region
      %94 = dma.done [#allocation3], 128
    $region37: #{ty_lstm_forward.1} parent=1 // pred_fallthru
      _
    // Predicated region
    $region38: #{ty_lstm_forward.1} parent=1 // pred_check
      _
    $region39: #{ty_lstm_forward.1} parent=1 // pred_check_branch
      %96 = sbr.rel (0) target = $region41
    $region40: #{ty_lstm_forward.1} parent=1 // pred_region
      %97 = dma.done [#allocation6], 128
    $region41: #{ty_lstm_forward.1} parent=1 // pred_fallthru
      _
    // Predicated region
    $region42: #{ty_lstm_forward.1} parent=1 // pred_check
      _
    $region43: #{ty_lstm_forward.1} parent=1 // pred_check_branch
      %99 = sbr.rel (0) target = $region45
    $region44: #{ty_lstm_forward.1} parent=1 // pred_region
      %100 = dma.done [#allocation6], 128
    $region45: #{ty_lstm_forward.1} parent=1 // pred_fallthru
      _
    // Predicated region
    $region46: #{ty_lstm_forward.1} parent=1 // pred_check
      _
    $region47: #{ty_lstm_forward.1} parent=1 // pred_check_branch
      %102 = sbr.rel (0) target = $region49
    $region48: #{ty_lstm_forward.1} parent=1 // pred_region
      %103 = dma.done [#allocation9], 4096
    $region49: #{ty_lstm_forward.1} parent=1 // pred_fallthru
      _
    // Predicated region
    $region50: #{ty_lstm_forward.1} parent=1 // pred_check
      _
    $region51: #{ty_lstm_forward.1} parent=1 // pred_check_branch
      %105 = sbr.rel (0) target = $region53
    $region52: #{ty_lstm_forward.1} parent=1 // pred_region
      %106 = dma.done [#allocation9], 2048
    $region53: #{ty_lstm_forward.1} parent=1 // pred_fallthru
      _
    // Predicated region
    $region54: #{ty_lstm_forward.1} parent=1 // pred_check
      _
    $region55: #{ty_lstm_forward.1} parent=1 // pred_check_branch
      %108 = sbr.rel (0) target = $region57
    $region56: #{ty_lstm_forward.1} parent=1 // pred_region
      %109 = dma.done [#allocation12], 1024
    $region57: #{ty_lstm_forward.1} parent=1 // pred_fallthru
      _
    %v111 = vld [vmem:[#allocation2] sm:$0xff]
    %v112 = vld [vmem:[#allocation5] sm:$0xff]
    %v113 = vld [vmem:[#allocation7] sm:$0xff]
    %v114 = vpack.c.bf16 %v111, %v111
    %v115 = vpack.c.bf16 %v112, %v112
    %v116 = vld [vmem:[#allocation8] sm:$0xff]
    %v117 = vld [vmem:[#allocation8 + $0x8] sm:$0xff]
    %v118 = vld [vmem:[#allocation8 + $0x10] sm:$0xff]
    %v119 = vld [vmem:[#allocation8 + $0x18] sm:$0xff]
    %v120 = vld [vmem:[#allocation8 + $0x20] sm:$0xff]
    %v121 = vld [vmem:[#allocation8 + $0x28] sm:$0xff]
    %v122 = vld [vmem:[#allocation8 + $0x30] sm:$0xff]
    %v123 = vld [vmem:[#allocation8 + $0x38] sm:$0xff]
    %v124 = vld [vmem:[#allocation8 + $0x40] sm:$0xff]
    %v125 = vld [vmem:[#allocation8 + $0x48] sm:$0xff]
    %v126 = vld [vmem:[#allocation8 + $0x50] sm:$0xff]
    %v127 = vld [vmem:[#allocation8 + $0x58] sm:$0xff]
    %v128 = vld [vmem:[#allocation8 + $0x60] sm:$0xff]
    %v129 = vld [vmem:[#allocation8 + $0x68] sm:$0xff]
    %v130 = vld [vmem:[#allocation8 + $0x70] sm:$0xff]
    %v131 = vld [vmem:[#allocation8 + $0x78] sm:$0xff]
    %v132 = vld [vmem:[#allocation8 + $0x80] sm:$0xff]
    %v133 = vld [vmem:[#allocation8 + $0x88] sm:$0xff]
    %v134 = vld [vmem:[#allocation8 + $0x90] sm:$0xff]
    %v135 = vld [vmem:[#allocation8 + $0x98] sm:$0xff]
    %v136 = vld [vmem:[#allocation8 + $0xa0] sm:$0xff]
    %v137 = vld [vmem:[#allocation8 + $0xa8] sm:$0xff]
    %v138 = vld [vmem:[#allocation8 + $0xb0] sm:$0xff]
    %v139 = vld [vmem:[#allocation8 + $0xb8] sm:$0xff]
    %v140 = vld [vmem:[#allocation8 + $0xc0] sm:$0xff]
    %v141 = vld [vmem:[#allocation8 + $0xc8] sm:$0xff]
    %v142 = vld [vmem:[#allocation8 + $0xd0] sm:$0xff]
    %v143 = vld [vmem:[#allocation8 + $0xd8] sm:$0xff]
    %v144 = vld [vmem:[#allocation8 + $0xe0] sm:$0xff]
    %v145 = vld [vmem:[#allocation8 + $0xe8] sm:$0xff]
    %v146 = vld [vmem:[#allocation8 + $0xf0] sm:$0xff]
    %v147 = vld [vmem:[#allocation8 + $0xf8] sm:$0xff]
    %v148 = vld [vmem:[#allocation10] sm:$0xff]
    %v149 = vld [vmem:[#allocation10 + $0x8] sm:$0xff]
    %v150 = vld [vmem:[#allocation10 + $0x10] sm:$0xff]
    %v151 = vld [vmem:[#allocation10 + $0x18] sm:$0xff]
    %v152 = vld [vmem:[#allocation10 + $0x20] sm:$0xff]
    %v153 = vld [vmem:[#allocation10 + $0x28] sm:$0xff]
    %v154 = vld [vmem:[#allocation10 + $0x30] sm:$0xff]
    %v155 = vld [vmem:[#allocation10 + $0x38] sm:$0xff]
    %v156 = vld [vmem:[#allocation10 + $0x40] sm:$0xff]
    %v157 = vld [vmem:[#allocation10 + $0x48] sm:$0xff]
    %v158 = vld [vmem:[#allocation10 + $0x50] sm:$0xff]
    %v159 = vld [vmem:[#allocation10 + $0x58] sm:$0xff]
    %v160 = vld [vmem:[#allocation10 + $0x60] sm:$0xff]
    %v161 = vld [vmem:[#allocation10 + $0x68] sm:$0xff]
    %v162 = vld [vmem:[#allocation10 + $0x70] sm:$0xff]
    %v163 = vld [vmem:[#allocation10 + $0x78] sm:$0xff]
    %v180 = vunpack.c.l.b16 %v148
    %v181 = vunpack.c.h.b16 %v148
    %v182 = vunpack.c.l.b16 %v149
    %v183 = vunpack.c.h.b16 %v149
    %v184 = vunpack.c.l.b16 %v150
    %v185 = vunpack.c.h.b16 %v150
    %v186 = vunpack.c.l.b16 %v151
    %v187 = vunpack.c.h.b16 %v151
    %v188 = vunpack.c.l.b16 %v152
    %v189 = vunpack.c.h.b16 %v152
    %v190 = vunpack.c.l.b16 %v153
    %v191 = vunpack.c.h.b16 %v153
    %v192 = vunpack.c.l.b16 %v154
    %v193 = vunpack.c.h.b16 %v154
    %v194 = vunpack.c.l.b16 %v155
    %v195 = vunpack.c.h.b16 %v155
    %v196 = vunpack.c.l.b16 %v156
    %v197 = vunpack.c.h.b16 %v156
    %v198 = vunpack.c.l.b16 %v157
    %v199 = vunpack.c.h.b16 %v157
    %v200 = vunpack.c.l.b16 %v158
    %v201 = vunpack.c.h.b16 %v158
    %v202 = vunpack.c.l.b16 %v159
    %v203 = vunpack.c.h.b16 %v159
    %v204 = vunpack.c.l.b16 %v160
    %v205 = vunpack.c.h.b16 %v160
    %v206 = vunpack.c.l.b16 %v161
    %v207 = vunpack.c.h.b16 %v161
    %v208 = vunpack.c.l.b16 %v162
    %v209 = vunpack.c.h.b16 %v162
    %v210 = vunpack.c.l.b16 %v163
    %v211 = vunpack.c.h.b16 %v163
    %v212 = vpack.c.b16 %v184, %v180
    %v213 = vpack.c.b16 %v185, %v181
    %v214 = vpack.c.b16 %v186, %v182
    %v215 = vpack.c.b16 %v187, %v183
    %v216 = vpack.c.b16 %v192, %v188
    %v217 = vpack.c.b16 %v193, %v189
    %v218 = vpack.c.b16 %v194, %v190
    %v219 = vpack.c.b16 %v195, %v191
    %v220 = vpack.c.b16 %v200, %v196
    %v221 = vpack.c.b16 %v201, %v197
    %v222 = vpack.c.b16 %v202, %v198
    %v223 = vpack.c.b16 %v203, %v199
    %v224 = vpack.c.b16 %v208, %v204
    %v225 = vpack.c.b16 %v209, %v205
    %v226 = vpack.c.b16 %v210, %v206
    %v227 = vpack.c.b16 %v211, %v207
    %vm244 = vcmask 523264
    %v246 = vsel %vm244, %v115, 0
    %248 = vmatprep.subr.bf16.mxu0 %v213
    %249 = vmatpush1.bf16.msra.mxu0 %v212
    %250 = vmatprep.subr.bf16.mxu0 %v217
    %251 = vmatpush1.bf16.msra.mxu0 %v216
    %252 = vmatprep.subr.bf16.mxu0 %v221
    %253 = vmatpush1.bf16.msra.mxu0 %v220
    %254 = vmatprep.subr.bf16.mxu0 %v225
    %255 = vmatpush1.bf16.msra.mxu0 %v224
    %256 = vmatprep.subr.bf16.mxu0 0
    %257 = vmatpush1.bf16.msra.mxu0 0
    %258 = vmatprep.subr.bf16.mxu0 0
    %259 = vmatpush1.bf16.msra.mxu0 0
    %260 = vmatprep.subr.bf16.mxu0 0
    %261 = vmatpush1.bf16.msra.mxu0 0
    %262 = vmatprep.subr.bf16.mxu0 0
    %263 = vmatpush1.bf16.msra.mxu0 0
    %264 = vmatprep.subr.bf16.mxu0 0
    %265 = vmatpush1.bf16.msra.mxu0 0
    %266 = vmatprep.subr.bf16.mxu0 0
    %267 = vmatpush1.bf16.msra.mxu0 0
    %268 = vmatprep.subr.bf16.mxu0 0
    %269 = vmatpush1.bf16.msra.mxu0 0
    %270 = vmatprep.subr.bf16.mxu0 0
    %271 = vmatpush1.bf16.msra.mxu0 0
    %272 = vmatprep.subr.bf16.mxu0 0
    %273 = vmatpush1.bf16.msra.mxu0 0
    %274 = vmatprep.subr.bf16.mxu0 0
    %275 = vmatpush1.bf16.msra.mxu0 0
    %276 = vmatprep.subr.bf16.mxu0 0
    %277 = vmatpush1.bf16.msra.mxu0 0
    %278 = vmatprep.subr.bf16.mxu0 0
    %279 = vmatpush1.bf16.msra.mxu0 0
    %280 = vmatprep.mubr.bf16.mxu0 0
    %281 = vmatmul.mubr.bf16.gmra.mrb[0].mxu0 %v246
    %v282 = vpop.f32.mrb[0].mxu0
    %v283 = vadd.f32 0.0, %v282
    %v284 = vpop.f32.mrb[0].mxu0
    %v285 = vadd.f32 0.0, %v284
    %v286 = vpop.f32.mrb[0].mxu0
    %v287 = vpop.f32.mrb[0].mxu0
    %288 = vdwg.mxu0
    %289 = vmatprep.subr.bf16.mxu0 %v215
    %290 = vmatpush1.bf16.msra.mxu0 %v214
    %291 = vmatprep.subr.bf16.mxu0 %v219
    %292 = vmatpush1.bf16.msra.mxu0 %v218
    %293 = vmatprep.subr.bf16.mxu0 %v223
    %294 = vmatpush1.bf16.msra.mxu0 %v222
    %295 = vmatprep.subr.bf16.mxu0 %v227
    %296 = vmatpush1.bf16.msra.mxu0 %v226
    %297 = vmatprep.subr.bf16.mxu0 0
    %298 = vmatpush1.bf16.msra.mxu0 0
    %299 = vmatprep.subr.bf16.mxu0 0
    %300 = vmatpush1.bf16.msra.mxu0 0
    %301 = vmatprep.subr.bf16.mxu0 0
    %302 = vmatpush1.bf16.msra.mxu0 0
    %303 = vmatprep.subr.bf16.mxu0 0
    %304 = vmatpush1.bf16.msra.mxu0 0
    %305 = vmatprep.subr.bf16.mxu0 0
    %306 = vmatpush1.bf16.msra.mxu0 0
    %307 = vmatprep.subr.bf16.mxu0 0
    %308 = vmatpush1.bf16.msra.mxu0 0
    %309 = vmatprep.subr.bf16.mxu0 0
    %310 = vmatpush1.bf16.msra.mxu0 0
    %311 = vmatprep.subr.bf16.mxu0 0
    %312 = vmatpush1.bf16.msra.mxu0 0
    %313 = vmatprep.subr.bf16.mxu0 0
    %314 = vmatpush1.bf16.msra.mxu0 0
    %315 = vmatprep.subr.bf16.mxu0 0
    %316 = vmatpush1.bf16.msra.mxu0 0
    %317 = vmatprep.subr.bf16.mxu0 0
    %318 = vmatpush1.bf16.msra.mxu0 0
    %319 = vmatprep.subr.bf16.mxu0 0
    %320 = vmatpush1.bf16.msra.mxu0 0
    %321 = vmatprep.mubr.bf16.mxu0 0
    %322 = vmatmul.mubr.bf16.gmra.mrb[0].mxu0 %v246
    %v323 = vpop.f32.mrb[0].mxu0
    %v324 = vadd.f32 0.0, %v323
    %v325 = vpop.f32.mrb[0].mxu0
    %v326 = vadd.f32 0.0, %v325
    %v327 = vpop.f32.mrb[0].mxu0
    %v328 = vpop.f32.mrb[0].mxu0
    %329 = vdwg.mxu0
    %v362 = vunpack.c.l.b16 %v116
    %v363 = vunpack.c.h.b16 %v116
    %v364 = vunpack.c.l.b16 %v117
    %v365 = vunpack.c.h.b16 %v117
    %v366 = vunpack.c.l.b16 %v118
    %v367 = vunpack.c.h.b16 %v118
    %v368 = vunpack.c.l.b16 %v119
    %v369 = vunpack.c.h.b16 %v119
    %v370 = vunpack.c.l.b16 %v120
    %v371 = vunpack.c.h.b16 %v120
    %v372 = vunpack.c.l.b16 %v121
    %v373 = vunpack.c.h.b16 %v121
    %v374 = vunpack.c.l.b16 %v122
    %v375 = vunpack.c.h.b16 %v122
    %v376 = vunpack.c.l.b16 %v123
    %v377 = vunpack.c.h.b16 %v123
    %v378 = vunpack.c.l.b16 %v124
    %v379 = vunpack.c.h.b16 %v124
    %v380 = vunpack.c.l.b16 %v125
    %v381 = vunpack.c.h.b16 %v125
    %v382 = vunpack.c.l.b16 %v126
    %v383 = vunpack.c.h.b16 %v126
    %v384 = vunpack.c.l.b16 %v127
    %v385 = vunpack.c.h.b16 %v127
    %v386 = vunpack.c.l.b16 %v128
    %v387 = vunpack.c.h.b16 %v128
    %v388 = vunpack.c.l.b16 %v129
    %v389 = vunpack.c.h.b16 %v129
    %v390 = vunpack.c.l.b16 %v130
    %v391 = vunpack.c.h.b16 %v130
    %v392 = vunpack.c.l.b16 %v131
    %v393 = vunpack.c.h.b16 %v131
    %v394 = vunpack.c.l.b16 %v132
    %v395 = vunpack.c.h.b16 %v132
    %v396 = vunpack.c.l.b16 %v133
    %v397 = vunpack.c.h.b16 %v133
    %v398 = vunpack.c.l.b16 %v134
    %v399 = vunpack.c.h.b16 %v134
    %v400 = vunpack.c.l.b16 %v135
    %v401 = vunpack.c.h.b16 %v135
    %v402 = vunpack.c.l.b16 %v136
    %v403 = vunpack.c.h.b16 %v136
    %v404 = vunpack.c.l.b16 %v137
    %v405 = vunpack.c.h.b16 %v137
    %v406 = vunpack.c.l.b16 %v138
    %v407 = vunpack.c.h.b16 %v138
    %v408 = vunpack.c.l.b16 %v139
    %v409 = vunpack.c.h.b16 %v139
    %v410 = vunpack.c.l.b16 %v140
    %v411 = vunpack.c.h.b16 %v140
    %v412 = vunpack.c.l.b16 %v141
    %v413 = vunpack.c.h.b16 %v141
    %v414 = vunpack.c.l.b16 %v142
    %v415 = vunpack.c.h.b16 %v142
    %v416 = vunpack.c.l.b16 %v143
    %v417 = vunpack.c.h.b16 %v143
    %v418 = vunpack.c.l.b16 %v144
    %v419 = vunpack.c.h.b16 %v144
    %v420 = vunpack.c.l.b16 %v145
    %v421 = vunpack.c.h.b16 %v145
    %v422 = vunpack.c.l.b16 %v146
    %v423 = vunpack.c.h.b16 %v146
    %v424 = vunpack.c.l.b16 %v147
    %v425 = vunpack.c.h.b16 %v147
    %v426 = vpack.c.b16 %v366, %v362
    %v427 = vpack.c.b16 %v367, %v363
    %v428 = vpack.c.b16 %v368, %v364
    %v429 = vpack.c.b16 %v369, %v365
    %v430 = vpack.c.b16 %v374, %v370
    %v431 = vpack.c.b16 %v375, %v371
    %v432 = vpack.c.b16 %v376, %v372
    %v433 = vpack.c.b16 %v377, %v373
    %v434 = vpack.c.b16 %v382, %v378
    %v435 = vpack.c.b16 %v383, %v379
    %v436 = vpack.c.b16 %v384, %v380
    %v437 = vpack.c.b16 %v385, %v381
    %v438 = vpack.c.b16 %v390, %v386
    %v439 = vpack.c.b16 %v391, %v387
    %v440 = vpack.c.b16 %v392, %v388
    %v441 = vpack.c.b16 %v393, %v389
    %v442 = vpack.c.b16 %v398, %v394
    %v443 = vpack.c.b16 %v399, %v395
    %v444 = vpack.c.b16 %v400, %v396
    %v445 = vpack.c.b16 %v401, %v397
    %v446 = vpack.c.b16 %v406, %v402
    %v447 = vpack.c.b16 %v407, %v403
    %v448 = vpack.c.b16 %v408, %v404
    %v449 = vpack.c.b16 %v409, %v405
    %v450 = vpack.c.b16 %v414, %v410
    %v451 = vpack.c.b16 %v415, %v411
    %v452 = vpack.c.b16 %v416, %v412
    %v453 = vpack.c.b16 %v417, %v413
    %v454 = vpack.c.b16 %v422, %v418
    %v455 = vpack.c.b16 %v423, %v419
    %v456 = vpack.c.b16 %v424, %v420
    %v457 = vpack.c.b16 %v425, %v421
    %490 = vmatprep.subr.bf16.mxu0 %v427
    %491 = vmatpush1.bf16.msra.mxu0 %v426
    %492 = vmatprep.subr.bf16.mxu0 %v431
    %493 = vmatpush1.bf16.msra.mxu0 %v430
    %494 = vmatprep.subr.bf16.mxu0 %v435
    %495 = vmatpush1.bf16.msra.mxu0 %v434
    %496 = vmatprep.subr.bf16.mxu0 %v439
    %497 = vmatpush1.bf16.msra.mxu0 %v438
    %498 = vmatprep.subr.bf16.mxu0 %v443
    %499 = vmatpush1.bf16.msra.mxu0 %v442
    %500 = vmatprep.subr.bf16.mxu0 %v447
    %501 = vmatpush1.bf16.msra.mxu0 %v446
    %502 = vmatprep.subr.bf16.mxu0 %v451
    %503 = vmatpush1.bf16.msra.mxu0 %v450
    %504 = vmatprep.subr.bf16.mxu0 %v455
    %505 = vmatpush1.bf16.msra.mxu0 %v454
    %506 = vmatprep.subr.bf16.mxu0 0
    %507 = vmatpush1.bf16.msra.mxu0 0
    %508 = vmatprep.subr.bf16.mxu0 0
    %509 = vmatpush1.bf16.msra.mxu0 0
    %510 = vmatprep.subr.bf16.mxu0 0
    %511 = vmatpush1.bf16.msra.mxu0 0
    %512 = vmatprep.subr.bf16.mxu0 0
    %513 = vmatpush1.bf16.msra.mxu0 0
    %514 = vmatprep.subr.bf16.mxu0 0
    %515 = vmatpush1.bf16.msra.mxu0 0
    %516 = vmatprep.subr.bf16.mxu0 0
    %517 = vmatpush1.bf16.msra.mxu0 0
    %518 = vmatprep.subr.bf16.mxu0 0
    %519 = vmatpush1.bf16.msra.mxu0 0
    %520 = vmatprep.subr.bf16.mxu0 0
    %521 = vmatpush1.bf16.msra.mxu0 0
    %522 = vmatprep.mubr.bf16.mxu0 0
    %523 = vmatmul.mubr.bf16.gmra.mrb[0].mxu0 %v114
    %v524 = vpop.f32.mrb[0].mxu0
    %v525 = vadd.f32 %v283, %v524
    %v526 = vpop.f32.mrb[0].mxu0
    %v527 = vadd.f32 %v285, %v526
    %v528 = vpop.f32.mrb[0].mxu0
    %v529 = vpop.f32.mrb[0].mxu0
    %530 = vdwg.mxu0
    %531 = vmatprep.subr.bf16.mxu0 %v429
    %532 = vmatpush1.bf16.msra.mxu0 %v428
    %533 = vmatprep.subr.bf16.mxu0 %v433
    %534 = vmatpush1.bf16.msra.mxu0 %v432
    %535 = vmatprep.subr.bf16.mxu0 %v437
    %536 = vmatpush1.bf16.msra.mxu0 %v436
    %537 = vmatprep.subr.bf16.mxu0 %v441
    %538 = vmatpush1.bf16.msra.mxu0 %v440
    %539 = vmatprep.subr.bf16.mxu0 %v445
    %540 = vmatpush1.bf16.msra.mxu0 %v444
    %541 = vmatprep.subr.bf16.mxu0 %v449
    %542 = vmatpush1.bf16.msra.mxu0 %v448
    %543 = vmatprep.subr.bf16.mxu0 %v453
    %544 = vmatpush1.bf16.msra.mxu0 %v452
    %545 = vmatprep.subr.bf16.mxu0 %v457
    %546 = vmatpush1.bf16.msra.mxu0 %v456
    %547 = vmatprep.subr.bf16.mxu0 0
    %548 = vmatpush1.bf16.msra.mxu0 0
    %549 = vmatprep.subr.bf16.mxu0 0
    %550 = vmatpush1.bf16.msra.mxu0 0
    %551 = vmatprep.subr.bf16.mxu0 0
    %552 = vmatpush1.bf16.msra.mxu0 0
    %553 = vmatprep.subr.bf16.mxu0 0
    %554 = vmatpush1.bf16.msra.mxu0 0
    %555 = vmatprep.subr.bf16.mxu0 0
    %556 = vmatpush1.bf16.msra.mxu0 0
    %557 = vmatprep.subr.bf16.mxu0 0
    %558 = vmatpush1.bf16.msra.mxu0 0
    %559 = vmatprep.subr.bf16.mxu0 0
    %560 = vmatpush1.bf16.msra.mxu0 0
    %561 = vmatprep.subr.bf16.mxu0 0
    %562 = vmatpush1.bf16.msra.mxu0 0
    %563 = vmatprep.mubr.bf16.mxu0 0
    %564 = vmatmul.mubr.bf16.gmra.mrb[0].mxu0 %v114
    %v565 = vpop.f32.mrb[0].mxu0
    %v566 = vadd.f32 %v324, %v565
    %v567 = vpop.f32.mrb[0].mxu0
    %v568 = vadd.f32 %v326, %v567
    %v569 = vpop.f32.mrb[0].mxu0
    %v570 = vpop.f32.mrb[0].mxu0
    %571 = vdwg.mxu0
    %v572 = vld [vmem:[%s5] sm:$0xf]
    %v574 = vlaneseq
    %v575 = vshrl.u32 %v574, 7
    %v576 = vsub.s32 0, %v575
    %v577 = vrot.slane %v572, %v576
    %v578 = vlaneseq
    %v579 = vshrl.u32 %v578, 7
    %v580 = vsub.s32 1, %v579
    %v581 = vrot.slane %v572, %v580
    %v582 = vlaneseq
    %v583 = vshrl.u32 %v582, 7
    %v584 = vsub.s32 2, %v583
    %v585 = vrot.slane %v572, %v584
    %v586 = vlaneseq
    %v587 = vshrl.u32 %v586, 7
    %v588 = vsub.s32 3, %v587
    %v589 = vrot.slane %v572, %v588
    %v594 = vadd.f32 %v525, %v577
    %v595 = vadd.f32 %v527, %v581
    %v596 = vadd.f32 %v566, %v585
    %v597 = vadd.f32 %v568, %v589
    %v598 = vxor.u32 %v594, 2147483648
    %v599 = vxor.u32 %v595, 2147483648
    %v600 = vxor.u32 %v596, 2147483648
    %v601 = vmul.f32 %v598, 1.442695
    %v602 = vpow.pop %v601
    %v603 = vmul.f32 %v599, 1.442695
    %v604 = vpow.pop %v603
    %v605 = vmul.f32 %v600, 1.442695
    %v606 = vpow.pop %v605
    %v607 = vadd.f32 %v602, 1.0
    %v608 = vadd.f32 %v604, 1.0
    %v609 = vadd.f32 %v606, 1.0
    %v610 = vrcp.pop %v607
    %v611 = vmul.f32 1.0, %v610
    %v612 = vrcp.pop %v608
    %v613 = vmul.f32 1.0, %v612
    %v614 = vrcp.pop %v609
    %v615 = vmul.f32 1.0, %v614
    %v616 = vtanh.pop %v597
    %v617 = vmul.f32 %v611, %v113
    %v618 = vmul.f32 %v613, %v616
    %v619 = vadd.f32 %v617, %v618
    %v620 = vtanh.pop %v619
    %v621 = vmul.f32 %v615, %v620
    %v622 = vpack.c.bf16 %v621, %v621
    %v623 = vld [vmem:[#allocation11] sm:$0xf]
    %v624 = vld [vmem:[#allocation11 + $0x4] sm:$0xf]
    %v625 = vld [vmem:[#allocation11 + $0x8] sm:$0xf]
    %v626 = vld [vmem:[#allocation11 + $0xc] sm:$0xf]
    %v627 = vld [vmem:[#allocation11 + $0x10] sm:$0xf]
    %v628 = vld [vmem:[#allocation11 + $0x14] sm:$0xf]
    %v629 = vld [vmem:[#allocation11 + $0x18] sm:$0xf]
    %v630 = vld [vmem:[#allocation11 + $0x1c] sm:$0xf]
    %v631 = vld [vmem:[#allocation11 + $0x20] sm:$0xf]
    %v632 = vld [vmem:[#allocation11 + $0x24] sm:$0xf]
    %v633 = vld [vmem:[#allocation11 + $0x28] sm:$0xf]
    %v634 = vld [vmem:[#allocation11 + $0x2c] sm:$0xf]
    %v635 = vld [vmem:[#allocation11 + $0x30] sm:$0xf]
    %v636 = vld [vmem:[#allocation11 + $0x34] sm:$0xf]
    %v637 = vld [vmem:[#allocation11 + $0x38] sm:$0xf]
    %v638 = vld [vmem:[#allocation11 + $0x3c] sm:$0xf]
    %v639 = vld [vmem:[%s7] sm:$0x1]
    %v641 = vlaneseq
    %v642 = vshrl.u32 %v641, 7
    %v643 = vsub.s32 0, %v642
    %v644 = vrot.slane %v639, %v643
    %v662 = vunpack.c.l.b16 %v623
    %v663 = vunpack.c.l.b16 %v624
    %v664 = vunpack.c.l.b16 %v625
    %v665 = vunpack.c.l.b16 %v626
    %v666 = vunpack.c.l.b16 %v627
    %v667 = vunpack.c.l.b16 %v628
    %v668 = vunpack.c.l.b16 %v629
    %v669 = vunpack.c.l.b16 %v630
    %v670 = vunpack.c.l.b16 %v631
    %v671 = vunpack.c.l.b16 %v632
    %v672 = vunpack.c.l.b16 %v633
    %v673 = vunpack.c.l.b16 %v634
    %v674 = vunpack.c.l.b16 %v635
    %v675 = vunpack.c.l.b16 %v636
    %v676 = vunpack.c.l.b16 %v637
    %v677 = vunpack.c.l.b16 %v638
    %v678 = vpack.c.b16 %v663, %v662
    %v679 = vpack.c.b16 %v665, %v664
    %v680 = vpack.c.b16 %v667, %v666
    %v681 = vpack.c.b16 %v669, %v668
    %v682 = vpack.c.b16 %v671, %v670
    %v683 = vpack.c.b16 %v673, %v672
    %v684 = vpack.c.b16 %v675, %v674
    %v685 = vpack.c.b16 %v677, %v676
    %694 = vmatprep.subr.bf16.mxu0 0
    %695 = vmatpush1.bf16.msra.mxu0 %v678
    %696 = vmatprep.subr.bf16.mxu0 0
    %697 = vmatpush1.bf16.msra.mxu0 %v679
    %698 = vmatprep.subr.bf16.mxu0 0
    %699 = vmatpush1.bf16.msra.mxu0 %v680
    %700 = vmatprep.subr.bf16.mxu0 0
    %701 = vmatpush1.bf16.msra.mxu0 %v681
    %702 = vmatprep.subr.bf16.mxu0 0
    %703 = vmatpush1.bf16.msra.mxu0 %v682
    %704 = vmatprep.subr.bf16.mxu0 0
    %705 = vmatpush1.bf16.msra.mxu0 %v683
    %706 = vmatprep.subr.bf16.mxu0 0
    %707 = vmatpush1.bf16.msra.mxu0 %v684
    %708 = vmatprep.subr.bf16.mxu0 0
    %709 = vmatpush1.bf16.msra.mxu0 %v685
    %710 = vmatprep.subr.bf16.mxu0 0
    %711 = vmatpush1.bf16.msra.mxu0 0
    %712 = vmatprep.subr.bf16.mxu0 0
    %713 = vmatpush1.bf16.msra.mxu0 0
    %714 = vmatprep.subr.bf16.mxu0 0
    %715 = vmatpush1.bf16.msra.mxu0 0
    %716 = vmatprep.subr.bf16.mxu0 0
    %717 = vmatpush1.bf16.msra.mxu0 0
    %718 = vmatprep.subr.bf16.mxu0 0
    %719 = vmatpush1.bf16.msra.mxu0 0
    %720 = vmatprep.subr.bf16.mxu0 0
    %721 = vmatpush1.bf16.msra.mxu0 0
    %722 = vmatprep.subr.bf16.mxu0 0
    %723 = vmatpush1.bf16.msra.mxu0 0
    %724 = vmatprep.subr.bf16.mxu0 0
    %725 = vmatpush1.bf16.msra.mxu0 0
    %726 = vmatprep.mubr.bf16.mxu0 0
    %727 = vmatmul.mubr.bf16.gmra.mrb[0].mxu0 %v622
    %v728 = vpop.f32.mrb[0].mxu0
    %v729 = vadd.f32 %v644, %v728
    %v730 = vpop.f32.mrb[0].mxu0
    %v731 = vpop.f32.mrb[0].mxu0
    %v732 = vpop.f32.mrb[0].mxu0
    %733 = vdwg.mxu0
    %734 = vst [vmem:[#allocation16] sm:$0xff] %v619
    %735 = vst [vmem:[#allocation14] sm:$0xff] %v621
    %736 = vst [vmem:[#allocation13] sm:$0xff] %v729
    // Predicated region
    $region58: #{ty_lstm_forward.1} parent=1 // pred_check
      _
    $region59: #{ty_lstm_forward.1} parent=1 // pred_check_branch
      %738 = sbr.rel (0) target = $region61
    $region60: #{ty_lstm_forward.1} parent=1 // pred_region
      %s740 = ssub.s32 128, 128
      %741 = vsyncadd [#allocation4], %s740
      %s743 = sshll.u32 [#allocation13], 4
      %s744 = int_to_ptr.vmem [resolvable:$true] %s743
      %746 = dma.vmem_to_hbm [thread:$0]  %s744, 128, %s8, [#allocation4]
    $region61: #{ty_lstm_forward.1} parent=1 // pred_fallthru
      _
    // Predicated region
    $region62: #{ty_lstm_forward.1} parent=1 // pred_check
      _
    $region63: #{ty_lstm_forward.1} parent=1 // pred_check_branch
      %748 = sbr.rel (0) target = $region65
    $region64: #{ty_lstm_forward.1} parent=1 // pred_region
      %s750 = ssub.s32 128, 128
      %751 = vsyncadd [#allocation15], %s750
      %s753 = sshll.u32 [#allocation14], 4
      %s754 = int_to_ptr.vmem [resolvable:$true] %s753
      %756 = dma.vmem_to_hbm [thread:$0]  %s754, 128, %s9, [#allocation15]
    $region65: #{ty_lstm_forward.1} parent=1 // pred_fallthru
      _
    // Predicated region
    $region66: #{ty_lstm_forward.1} parent=1 // pred_check
      _
    $region67: #{ty_lstm_forward.1} parent=1 // pred_check_branch
      %758 = sbr.rel (0) target = $region69
    $region68: #{ty_lstm_forward.1} parent=1 // pred_region
      %s760 = ssub.s32 128, 128
      %761 = vsyncadd [#allocation15], %s760
      %s763 = sshll.u32 [#allocation16], 4
      %s764 = int_to_ptr.vmem [resolvable:$true] %s763
      %766 = dma.vmem_to_hbm [thread:$0]  %s764, 128, %s10, [#allocation15]
    $region69: #{ty_lstm_forward.1} parent=1 // pred_fallthru
      _
    // Predicated region
    $region70: #{ty_lstm_forward.1} parent=1 // pred_check
      _
    $region71: #{ty_lstm_forward.1} parent=1 // pred_check_branch
      %768 = sbr.rel (0) target = $region73
    $region72: #{ty_lstm_forward.1} parent=1 // pred_region
      %769 = dma.done [#allocation4], 128
    $region73: #{ty_lstm_forward.1} parent=1 // pred_fallthru
      _
    // Predicated region
    $region74: #{ty_lstm_forward.1} parent=1 // pred_check
      _
    $region75: #{ty_lstm_forward.1} parent=1 // pred_check_branch
      %771 = sbr.rel (0) target = $region77
    $region76: #{ty_lstm_forward.1} parent=1 // pred_region
      %772 = dma.done [#allocation15], 128
    $region77: #{ty_lstm_forward.1} parent=1 // pred_fallthru
      _
    // Predicated region
    $region78: #{ty_lstm_forward.1} parent=1 // pred_check
      _
    $region79: #{ty_lstm_forward.1} parent=1 // pred_check_branch
      %774 = sbr.rel (0) target = $region81
    $region80: #{ty_lstm_forward.1} parent=1 // pred_region
      %775 = dma.done [#allocation15], 128
    $region81: #{ty_lstm_forward.1} parent=1 // pred_fallthru
      _
    %776 = vsyncpa [#allocation3], 1
    %777 = vsyncpa [#allocation6], 1
    %778 = vsyncpa [#allocation9], 1
    %779 = vsyncpa [#allocation12], 1
    %780 = vsyncpa [#allocation4], 1
    %781 = vsyncpa [#allocation15], 1

</llo_original>
